<compile_context>
chip_gen: v7x
topology: tpu7x:2x2x1
jax: 0.10.0
libtpu: 0.0.40
codegen_flags: <defaults>
</compile_context>

<pallas_src>
import jax
import jax.numpy as jnp
import numpy as np
from jax.experimental import pallas as pl
from jax.experimental.pallas import tpu as pltpu


def gru_session_kernel(x_ref, w_ref, b_ref, o_ref):
    """Full GRU recurrence over time inside one kernel invocation.

    x_ref : (B, T, I)    input (any float dtype), batch-first
    w_ref : (I+H, 3H)    bf16 fused weights: rows [0,I) = W_ih^T,
                         rows [I,I+H) = W_hh^T, gate order [r | z | n]
    b_ref : (2, 3H)      f32: row 0 = [b_ir+b_hr | b_iz+b_hz | b_in],
                         row 1 = [b_hn | 0 | 0]
    o_ref : (B, H)       f32 final hidden state
    """
    B, T, I = x_ref.shape
    H = o_ref.shape[-1]
    H2 = 2 * H
    H3 = 3 * H

    # Static slices of the fused weight slab (sublane offsets 0 and I are
    # 8-aligned; slices are views, no extra data movement).
    wih = w_ref[0:I, :]            # (I, 3H) bf16
    whh = w_ref[I:I + H, :]        # (H, 3H) bf16

    b = b_ref[...]                 # (2, 3H) f32
    bx = b[0:1, :]                 # (1, 3H)  pre-summed biases
    b_hn = jnp.broadcast_to(b[1:2, 0:H], (B, H))   # hoisted broadcast

    # Hoisted input projection: one MXU call covers every timestep.
    # bf16 operands, f32 accumulation.
    x_flat = x_ref[...].astype(jnp.bfloat16).reshape(B * T, I)
    gx_all = jnp.dot(x_flat, wih, preferred_element_type=jnp.float32)
    gx_all = (gx_all + bx).reshape(B, T, H3)

    h = jnp.zeros((B, H), jnp.float32)

    # T is small and static: fully unroll the recurrence so the scheduler can
    # overlap non-dependent work across steps.
    for t in range(T):
        gx = gx_all[:, t, :]                                       # (B, 3H)
        if t == 0:
            gh = jnp.zeros((B, H3), jnp.float32)                   # h_0 == 0
        else:
            gh = jnp.dot(h.astype(jnp.bfloat16), whh,
                         preferred_element_type=jnp.float32)       # (B, 3H)
        # Fused r,z sigmoid over a (B, 2H) slab — single EUP push.
        rz = jax.nn.sigmoid(gx[:, :H2] + gh[:, :H2])
        r = rz[:, :H]
        z = rz[:, H:]
        n = jnp.tanh(gx[:, H2:] + r * (gh[:, H2:] + b_hn))
        # h = (1 - z) * n + z * h, with one fewer op on the serial chain.
        h = n + z * (h - n)

    o_ref[...] = h


def prepare_gru_params(w_ih, w_hh, b_ih, b_hh, hid_size):
    """One-time repack of PyTorch GRU parameters into the fused kernel layout.

    PyTorch layout: weight_ih_l0 (3H, I), weight_hh_l0 (3H, H),
    bias_ih_l0 (3H,), bias_hh_l0 (3H,), gate order [r, z, n].
    """
    H = hid_size
    w_ih = jnp.asarray(w_ih, jnp.float32)
    w_hh = jnp.asarray(w_hh, jnp.float32)
    b_ih = jnp.asarray(b_ih, jnp.float32)
    b_hh = jnp.asarray(b_hh, jnp.float32)

    # Single weight slab (I+H, 3H), bf16 MXU operands (accumulation stays f32).
    w_fused = jnp.concatenate([w_ih.T, w_hh.T], axis=0).astype(jnp.bfloat16)

    # Single bias slab (2, 3H), f32:
    #   row 0: b_ir+b_hr | b_iz+b_hz | b_in   (folded into the input slab)
    #   row 1: b_hn | 0 | 0                    (must stay inside r*(h@W_hn+b_hn))
    bx = jnp.concatenate([b_ih[:H] + b_hh[:H],
                          b_ih[H:2 * H] + b_hh[H:2 * H],
                          b_ih[2 * H:]])
    bhn_row = jnp.zeros((3 * H,), jnp.float32).at[:H].set(b_hh[2 * H:])
    b_fused = jnp.stack([bx, bhn_row], axis=0)
    return w_fused, b_fused


def session_encoder_forward(x_btc, params, hid_size):
    """x_btc: (B, T, I) batch-first input. Returns (B, 1, H)."""
    B, T, I = x_btc.shape
    H = hid_size
    w_fused, b_fused = params

    vmem = pl.BlockSpec(memory_space=pltpu.MemorySpace.VMEM)
    h_last = pl.pallas_call(
        gru_session_kernel,
        out_shape=jax.ShapeDtypeStruct((B, H), jnp.float32),
        in_specs=[vmem, vmem, vmem],
        out_specs=vmem,
    )(x_btc, w_fused, b_fused)

    # o.view(B, -1, H) with num_layers * num_directions == 1  ->  (B, 1, H)
    return h_last.reshape(B, 1, H)


def gru_reference(x_btc, w_ih, w_hh, b_ih, b_hh, hid_size):
    """Pure-JAX f32 reference implementation of the PyTorch GRU (eval mode)."""
    B, T, I = x_btc.shape
    H = hid_size
    w_ir, w_iz, w_in = w_ih[:H], w_ih[H:2 * H], w_ih[2 * H:]
    w_hr, w_hz, w_hn = w_hh[:H], w_hh[H:2 * H], w_hh[2 * H:]
    b_ir, b_iz, b_in = b_ih[:H], b_ih[H:2 * H], b_ih[2 * H:]
    b_hr, b_hz, b_hn = b_hh[:H], b_hh[H:2 * H], b_hh[2 * H:]

    h = jnp.zeros((B, H), jnp.float32)
    for t in range(T):
        x_t = x_btc[:, t, :]
        r = jax.nn.sigmoid(x_t @ w_ir.T + b_ir + h @ w_hr.T + b_hr)
        z = jax.nn.sigmoid(x_t @ w_iz.T + b_iz + h @ w_hz.T + b_hz)
        n = jnp.tanh(x_t @ w_in.T + b_in + r * (h @ w_hn.T + b_hn))
        h = (1.0 - z) * n + z * h
    return h.reshape(B, 1, H)


if __name__ == "__main__":
    # Small shapes consistent with the module: batch=2, seq=8, inp=32, hid=32.
    B, T, INP, HID = 2, 8, 32, 32

    key = jax.random.PRNGKey(0)
    kx, k1, k2, k3, k4 = jax.random.split(key, 5)

    x = jax.random.normal(kx, (B, T, INP), dtype=jnp.float32)

    # Deterministic parameter init, matching PyTorch GRU shapes and its
    # U(-1/sqrt(H), 1/sqrt(H)) default initialization.
    bound = 1.0 / np.sqrt(HID)
    w_ih = jax.random.uniform(k1, (3 * HID, INP), jnp.float32, -bound, bound)
    w_hh = jax.random.uniform(k2, (3 * HID, HID), jnp.float32, -bound, bound)
    b_ih = jax.random.uniform(k3, (3 * HID,), jnp.float32, -bound, bound)
    b_hh = jax.random.uniform(k4, (3 * HID,), jnp.float32, -bound, bound)

    # Weight repack happens once, outside the forward call.
    params = prepare_gru_params(w_ih, w_hh, b_ih, b_hh, HID)

    out = session_encoder_forward(x, params, HID)
    out = jax.block_until_ready(out)

    ref = gru_reference(x, w_ih, w_hh, b_ih, b_hh, HID)
    ref = jax.block_until_ready(ref)

    assert out.shape == (B, 1, HID), out.shape
    # Tolerance relaxed vs. the pure-f32 kernel: bf16 MXU operands compound
    # rounding over the 8-step recurrence (accumulation itself stays f32).
    np.testing.assert_allclose(np.asarray(out), np.asarray(ref),
                               rtol=2e-2, atol=2e-2)

    print("KERNEL_OK")
</pallas_src>

<mosaic_0001>
module attributes {stable_mosaic.version = 11 : i64} {
  func.func @gru_session_kernel(%arg0: memref<2x8x32xf32, #tpu.memory_space<vmem>>, %arg1: memref<64x96xbf16, #tpu.memory_space<vmem>>, %arg2: memref<2x96xf32, #tpu.memory_space<vmem>>, %arg3: memref<2x32xf32, #tpu.memory_space<vmem>>) attributes {dimension_semantics = [], scalar_prefetch = 0 : i64, scratch_operands = 0 : i64, tpu.core_type = #tpu.core_type<tc>} {
    %c0 = arith.constant 0 : index
    %c0_0 = arith.constant 0 : index
    %0 = vector.load %arg1[%c0, %c0_0] : memref<64x96xbf16, #tpu.memory_space<vmem>>, vector<32x96xbf16>
    %c32 = arith.constant 32 : index
    %c0_1 = arith.constant 0 : index
    %1 = vector.load %arg1[%c32, %c0_1] : memref<64x96xbf16, #tpu.memory_space<vmem>>, vector<32x96xbf16>
    %c0_2 = arith.constant 0 : index
    %c0_3 = arith.constant 0 : index
    %2 = vector.load %arg2[%c0_2, %c0_3] : memref<2x96xf32, #tpu.memory_space<vmem>>, vector<2x96xf32>
    %3 = vector.extract_strided_slice %2 {offsets = [0, 0], sizes = [1, 96], strides = [1, 1]} : vector<2x96xf32> to vector<1x96xf32>
    %4 = vector.extract_strided_slice %2 {offsets = [1, 0], sizes = [1, 32], strides = [1, 1]} : vector<2x96xf32> to vector<1x32xf32>
    %5 = vector.shape_cast %4 : vector<1x32xf32> to vector<1x32xf32>
    %6 = vector.broadcast %5 : vector<1x32xf32> to vector<2x32xf32>
    %c0_4 = arith.constant 0 : index
    %c0_5 = arith.constant 0 : index
    %c0_6 = arith.constant 0 : index
    %7 = vector.load %arg0[%c0_4, %c0_5, %c0_6] : memref<2x8x32xf32, #tpu.memory_space<vmem>>, vector<2x8x32xf32>
    %8 = arith.truncf %7 : vector<2x8x32xf32> to vector<2x8x32xbf16>
    %9 = vector.shape_cast %8 : vector<2x8x32xbf16> to vector<16x32xbf16>
    %cst = arith.constant dense<0.000000e+00> : vector<16x96xf32>
    %10 = tpu.matmul %9, %0, %cst {dimension_numbers = #tpu.dot_dimension_numbers<[1], [0], [0], [1], [0, 0, 1, 1], [], []>} : vector<16x32xbf16>, vector<32x96xbf16>, vector<16x96xf32> -> vector<16x96xf32>
    %11 = vector.broadcast %3 : vector<1x96xf32> to vector<16x96xf32>
    %12 = arith.addf %10, %11 : vector<16x96xf32>
    %13 = vector.shape_cast %12 : vector<16x96xf32> to vector<2x8x96xf32>
    %cst_7 = arith.constant 0.000000e+00 : f32
    %14 = vector.broadcast %cst_7 : f32 to vector<2x32xf32>
    %15 = vector.extract_strided_slice %13 {offsets = [0, 0, 0], sizes = [2, 1, 96], strides = [1, 1, 1]} : vector<2x8x96xf32> to vector<2x1x96xf32>
    %16 = vector.shape_cast %15 : vector<2x1x96xf32> to vector<2x96xf32>
    %cst_8 = arith.constant 0.000000e+00 : f32
    %17 = vector.broadcast %cst_8 : f32 to vector<2x96xf32>
    %18 = vector.extract_strided_slice %16 {offsets = [0, 0], sizes = [2, 64], strides = [1, 1]} : vector<2x96xf32> to vector<2x64xf32>
    %19 = vector.extract_strided_slice %17 {offsets = [0, 0], sizes = [2, 64], strides = [1, 1]} : vector<2x96xf32> to vector<2x64xf32>
    %20 = arith.addf %18, %19 : vector<2x64xf32>
    %21 = arith.negf %20 : vector<2x64xf32>
    %22 = math.exp %21 : vector<2x64xf32>
    %cst_9 = arith.constant 1.000000e+00 : f32
    %23 = vector.broadcast %cst_9 : f32 to vector<2x64xf32>
    %24 = arith.addf %23, %22 : vector<2x64xf32>
    %25 = arith.divf %23, %24 : vector<2x64xf32>
    %26 = vector.extract_strided_slice %25 {offsets = [0, 0], sizes = [2, 32], strides = [1, 1]} : vector<2x64xf32> to vector<2x32xf32>
    %27 = vector.extract_strided_slice %25 {offsets = [0, 32], sizes = [2, 32], strides = [1, 1]} : vector<2x64xf32> to vector<2x32xf32>
    %28 = vector.extract_strided_slice %16 {offsets = [0, 64], sizes = [2, 32], strides = [1, 1]} : vector<2x96xf32> to vector<2x32xf32>
    %29 = vector.extract_strided_slice %17 {offsets = [0, 64], sizes = [2, 32], strides = [1, 1]} : vector<2x96xf32> to vector<2x32xf32>
    %30 = arith.addf %29, %6 : vector<2x32xf32>
    %31 = arith.mulf %26, %30 : vector<2x32xf32>
    %32 = arith.addf %28, %31 : vector<2x32xf32>
    %33 = math.tanh %32 : vector<2x32xf32>
    %34 = arith.subf %14, %33 : vector<2x32xf32>
    %35 = arith.mulf %27, %34 : vector<2x32xf32>
    %36 = arith.addf %33, %35 : vector<2x32xf32>
    %37 = vector.extract_strided_slice %13 {offsets = [0, 1, 0], sizes = [2, 1, 96], strides = [1, 1, 1]} : vector<2x8x96xf32> to vector<2x1x96xf32>
    %38 = vector.shape_cast %37 : vector<2x1x96xf32> to vector<2x96xf32>
    %39 = arith.truncf %36 : vector<2x32xf32> to vector<2x32xbf16>
    %cst_10 = arith.constant dense<0.000000e+00> : vector<2x96xf32>
    %40 = tpu.matmul %39, %1, %cst_10 {dimension_numbers = #tpu.dot_dimension_numbers<[1], [0], [0], [1], [0, 0, 1, 1], [], []>} : vector<2x32xbf16>, vector<32x96xbf16>, vector<2x96xf32> -> vector<2x96xf32>
    %41 = vector.extract_strided_slice %38 {offsets = [0, 0], sizes = [2, 64], strides = [1, 1]} : vector<2x96xf32> to vector<2x64xf32>
    %42 = vector.extract_strided_slice %40 {offsets = [0, 0], sizes = [2, 64], strides = [1, 1]} : vector<2x96xf32> to vector<2x64xf32>
    %43 = arith.addf %41, %42 : vector<2x64xf32>
    %44 = arith.negf %43 : vector<2x64xf32>
    %45 = math.exp %44 : vector<2x64xf32>
    %cst_11 = arith.constant 1.000000e+00 : f32
    %46 = vector.broadcast %cst_11 : f32 to vector<2x64xf32>
    %47 = arith.addf %46, %45 : vector<2x64xf32>
    %48 = arith.divf %46, %47 : vector<2x64xf32>
    %49 = vector.extract_strided_slice %48 {offsets = [0, 0], sizes = [2, 32], strides = [1, 1]} : vector<2x64xf32> to vector<2x32xf32>
    %50 = vector.extract_strided_slice %48 {offsets = [0, 32], sizes = [2, 32], strides = [1, 1]} : vector<2x64xf32> to vector<2x32xf32>
    %51 = vector.extract_strided_slice %38 {offsets = [0, 64], sizes = [2, 32], strides = [1, 1]} : vector<2x96xf32> to vector<2x32xf32>
    %52 = vector.extract_strided_slice %40 {offsets = [0, 64], sizes = [2, 32], strides = [1, 1]} : vector<2x96xf32> to vector<2x32xf32>
    %53 = arith.addf %52, %6 : vector<2x32xf32>
    %54 = arith.mulf %49, %53 : vector<2x32xf32>
    %55 = arith.addf %51, %54 : vector<2x32xf32>
    %56 = math.tanh %55 : vector<2x32xf32>
    %57 = arith.subf %36, %56 : vector<2x32xf32>
    %58 = arith.mulf %50, %57 : vector<2x32xf32>
    %59 = arith.addf %56, %58 : vector<2x32xf32>
    %60 = vector.extract_strided_slice %13 {offsets = [0, 2, 0], sizes = [2, 1, 96], strides = [1, 1, 1]} : vector<2x8x96xf32> to vector<2x1x96xf32>
    %61 = vector.shape_cast %60 : vector<2x1x96xf32> to vector<2x96xf32>
    %62 = arith.truncf %59 : vector<2x32xf32> to vector<2x32xbf16>
    %cst_12 = arith.constant dense<0.000000e+00> : vector<2x96xf32>
    %63 = tpu.matmul %62, %1, %cst_12 {dimension_numbers = #tpu.dot_dimension_numbers<[1], [0], [0], [1], [0, 0, 1, 1], [], []>} : vector<2x32xbf16>, vector<32x96xbf16>, vector<2x96xf32> -> vector<2x96xf32>
    %64 = vector.extract_strided_slice %61 {offsets = [0, 0], sizes = [2, 64], strides = [1, 1]} : vector<2x96xf32> to vector<2x64xf32>
    %65 = vector.extract_strided_slice %63 {offsets = [0, 0], sizes = [2, 64], strides = [1, 1]} : vector<2x96xf32> to vector<2x64xf32>
    %66 = arith.addf %64, %65 : vector<2x64xf32>
    %67 = arith.negf %66 : vector<2x64xf32>
    %68 = math.exp %67 : vector<2x64xf32>
    %cst_13 = arith.constant 1.000000e+00 : f32
    %69 = vector.broadcast %cst_13 : f32 to vector<2x64xf32>
    %70 = arith.addf %69, %68 : vector<2x64xf32>
    %71 = arith.divf %69, %70 : vector<2x64xf32>
    %72 = vector.extract_strided_slice %71 {offsets = [0, 0], sizes = [2, 32], strides = [1, 1]} : vector<2x64xf32> to vector<2x32xf32>
    %73 = vector.extract_strided_slice %71 {offsets = [0, 32], sizes = [2, 32], strides = [1, 1]} : vector<2x64xf32> to vector<2x32xf32>
    %74 = vector.extract_strided_slice %61 {offsets = [0, 64], sizes = [2, 32], strides = [1, 1]} : vector<2x96xf32> to vector<2x32xf32>
    %75 = vector.extract_strided_slice %63 {offsets = [0, 64], sizes = [2, 32], strides = [1, 1]} : vector<2x96xf32> to vector<2x32xf32>
    %76 = arith.addf %75, %6 : vector<2x32xf32>
    %77 = arith.mulf %72, %76 : vector<2x32xf32>
    %78 = arith.addf %74, %77 : vector<2x32xf32>
    %79 = math.tanh %78 : vector<2x32xf32>
    %80 = arith.subf %59, %79 : vector<2x32xf32>
    %81 = arith.mulf %73, %80 : vector<2x32xf32>
    %82 = arith.addf %79, %81 : vector<2x32xf32>
    %83 = vector.extract_strided_slice %13 {offsets = [0, 3, 0], sizes = [2, 1, 96], strides = [1, 1, 1]} : vector<2x8x96xf32> to vector<2x1x96xf32>
    %84 = vector.shape_cast %83 : vector<2x1x96xf32> to vector<2x96xf32>
    %85 = arith.truncf %82 : vector<2x32xf32> to vector<2x32xbf16>
    %cst_14 = arith.constant dense<0.000000e+00> : vector<2x96xf32>
    %86 = tpu.matmul %85, %1, %cst_14 {dimension_numbers = #tpu.dot_dimension_numbers<[1], [0], [0], [1], [0, 0, 1, 1], [], []>} : vector<2x32xbf16>, vector<32x96xbf16>, vector<2x96xf32> -> vector<2x96xf32>
    %87 = vector.extract_strided_slice %84 {offsets = [0, 0], sizes = [2, 64], strides = [1, 1]} : vector<2x96xf32> to vector<2x64xf32>
    %88 = vector.extract_strided_slice %86 {offsets = [0, 0], sizes = [2, 64], strides = [1, 1]} : vector<2x96xf32> to vector<2x64xf32>
    %89 = arith.addf %87, %88 : vector<2x64xf32>
    %90 = arith.negf %89 : vector<2x64xf32>
    %91 = math.exp %90 : vector<2x64xf32>
    %cst_15 = arith.constant 1.000000e+00 : f32
    %92 = vector.broadcast %cst_15 : f32 to vector<2x64xf32>
    %93 = arith.addf %92, %91 : vector<2x64xf32>
    %94 = arith.divf %92, %93 : vector<2x64xf32>
    %95 = vector.extract_strided_slice %94 {offsets = [0, 0], sizes = [2, 32], strides = [1, 1]} : vector<2x64xf32> to vector<2x32xf32>
    %96 = vector.extract_strided_slice %94 {offsets = [0, 32], sizes = [2, 32], strides = [1, 1]} : vector<2x64xf32> to vector<2x32xf32>
    %97 = vector.extract_strided_slice %84 {offsets = [0, 64], sizes = [2, 32], strides = [1, 1]} : vector<2x96xf32> to vector<2x32xf32>
    %98 = vector.extract_strided_slice %86 {offsets = [0, 64], sizes = [2, 32], strides = [1, 1]} : vector<2x96xf32> to vector<2x32xf32>
    %99 = arith.addf %98, %6 : vector<2x32xf32>
    %100 = arith.mulf %95, %99 : vector<2x32xf32>
    %101 = arith.addf %97, %100 : vector<2x32xf32>
    %102 = math.tanh %101 : vector<2x32xf32>
    %103 = arith.subf %82, %102 : vector<2x32xf32>
    %104 = arith.mulf %96, %103 : vector<2x32xf32>
    %105 = arith.addf %102, %104 : vector<2x32xf32>
    %106 = vector.extract_strided_slice %13 {offsets = [0, 4, 0], sizes = [2, 1, 96], strides = [1, 1, 1]} : vector<2x8x96xf32> to vector<2x1x96xf32>
    %107 = vector.shape_cast %106 : vector<2x1x96xf32> to vector<2x96xf32>
    %108 = arith.truncf %105 : vector<2x32xf32> to vector<2x32xbf16>
    %cst_16 = arith.constant dense<0.000000e+00> : vector<2x96xf32>
    %109 = tpu.matmul %108, %1, %cst_16 {dimension_numbers = #tpu.dot_dimension_numbers<[1], [0], [0], [1], [0, 0, 1, 1], [], []>} : vector<2x32xbf16>, vector<32x96xbf16>, vector<2x96xf32> -> vector<2x96xf32>
    %110 = vector.extract_strided_slice %107 {offsets = [0, 0], sizes = [2, 64], strides = [1, 1]} : vector<2x96xf32> to vector<2x64xf32>
    %111 = vector.extract_strided_slice %109 {offsets = [0, 0], sizes = [2, 64], strides = [1, 1]} : vector<2x96xf32> to vector<2x64xf32>
    %112 = arith.addf %110, %111 : vector<2x64xf32>
    %113 = arith.negf %112 : vector<2x64xf32>
    %114 = math.exp %113 : vector<2x64xf32>
    %cst_17 = arith.constant 1.000000e+00 : f32
    %115 = vector.broadcast %cst_17 : f32 to vector<2x64xf32>
    %116 = arith.addf %115, %114 : vector<2x64xf32>
    %117 = arith.divf %115, %116 : vector<2x64xf32>
    %118 = vector.extract_strided_slice %117 {offsets = [0, 0], sizes = [2, 32], strides = [1, 1]} : vector<2x64xf32> to vector<2x32xf32>
    %119 = vector.extract_strided_slice %117 {offsets = [0, 32], sizes = [2, 32], strides = [1, 1]} : vector<2x64xf32> to vector<2x32xf32>
    %120 = vector.extract_strided_slice %107 {offsets = [0, 64], sizes = [2, 32], strides = [1, 1]} : vector<2x96xf32> to vector<2x32xf32>
    %121 = vector.extract_strided_slice %109 {offsets = [0, 64], sizes = [2, 32], strides = [1, 1]} : vector<2x96xf32> to vector<2x32xf32>
    %122 = arith.addf %121, %6 : vector<2x32xf32>
    %123 = arith.mulf %118, %122 : vector<2x32xf32>
    %124 = arith.addf %120, %123 : vector<2x32xf32>
    %125 = math.tanh %124 : vector<2x32xf32>
    %126 = arith.subf %105, %125 : vector<2x32xf32>
    %127 = arith.mulf %119, %126 : vector<2x32xf32>
    %128 = arith.addf %125, %127 : vector<2x32xf32>
    %129 = vector.extract_strided_slice %13 {offsets = [0, 5, 0], sizes = [2, 1, 96], strides = [1, 1, 1]} : vector<2x8x96xf32> to vector<2x1x96xf32>
    %130 = vector.shape_cast %129 : vector<2x1x96xf32> to vector<2x96xf32>
    %131 = arith.truncf %128 : vector<2x32xf32> to vector<2x32xbf16>
    %cst_18 = arith.constant dense<0.000000e+00> : vector<2x96xf32>
    %132 = tpu.matmul %131, %1, %cst_18 {dimension_numbers = #tpu.dot_dimension_numbers<[1], [0], [0], [1], [0, 0, 1, 1], [], []>} : vector<2x32xbf16>, vector<32x96xbf16>, vector<2x96xf32> -> vector<2x96xf32>
    %133 = vector.extract_strided_slice %130 {offsets = [0, 0], sizes = [2, 64], strides = [1, 1]} : vector<2x96xf32> to vector<2x64xf32>
    %134 = vector.extract_strided_slice %132 {offsets = [0, 0], sizes = [2, 64], strides = [1, 1]} : vector<2x96xf32> to vector<2x64xf32>
    %135 = arith.addf %133, %134 : vector<2x64xf32>
    %136 = arith.negf %135 : vector<2x64xf32>
    %137 = math.exp %136 : vector<2x64xf32>
    %cst_19 = arith.constant 1.000000e+00 : f32
    %138 = vector.broadcast %cst_19 : f32 to vector<2x64xf32>
    %139 = arith.addf %138, %137 : vector<2x64xf32>
    %140 = arith.divf %138, %139 : vector<2x64xf32>
    %141 = vector.extract_strided_slice %140 {offsets = [0, 0], sizes = [2, 32], strides = [1, 1]} : vector<2x64xf32> to vector<2x32xf32>
    %142 = vector.extract_strided_slice %140 {offsets = [0, 32], sizes = [2, 32], strides = [1, 1]} : vector<2x64xf32> to vector<2x32xf32>
    %143 = vector.extract_strided_slice %130 {offsets = [0, 64], sizes = [2, 32], strides = [1, 1]} : vector<2x96xf32> to vector<2x32xf32>
    %144 = vector.extract_strided_slice %132 {offsets = [0, 64], sizes = [2, 32], strides = [1, 1]} : vector<2x96xf32> to vector<2x32xf32>
    %145 = arith.addf %144, %6 : vector<2x32xf32>
    %146 = arith.mulf %141, %145 : vector<2x32xf32>
    %147 = arith.addf %143, %146 : vector<2x32xf32>
    %148 = math.tanh %147 : vector<2x32xf32>
    %149 = arith.subf %128, %148 : vector<2x32xf32>
    %150 = arith.mulf %142, %149 : vector<2x32xf32>
    %151 = arith.addf %148, %150 : vector<2x32xf32>
    %152 = vector.extract_strided_slice %13 {offsets = [0, 6, 0], sizes = [2, 1, 96], strides = [1, 1, 1]} : vector<2x8x96xf32> to vector<2x1x96xf32>
    %153 = vector.shape_cast %152 : vector<2x1x96xf32> to vector<2x96xf32>
    %154 = arith.truncf %151 : vector<2x32xf32> to vector<2x32xbf16>
    %cst_20 = arith.constant dense<0.000000e+00> : vector<2x96xf32>
    %155 = tpu.matmul %154, %1, %cst_20 {dimension_numbers = #tpu.dot_dimension_numbers<[1], [0], [0], [1], [0, 0, 1, 1], [], []>} : vector<2x32xbf16>, vector<32x96xbf16>, vector<2x96xf32> -> vector<2x96xf32>
    %156 = vector.extract_strided_slice %153 {offsets = [0, 0], sizes = [2, 64], strides = [1, 1]} : vector<2x96xf32> to vector<2x64xf32>
    %157 = vector.extract_strided_slice %155 {offsets = [0, 0], sizes = [2, 64], strides = [1, 1]} : vector<2x96xf32> to vector<2x64xf32>
    %158 = arith.addf %156, %157 : vector<2x64xf32>
    %159 = arith.negf %158 : vector<2x64xf32>
    %160 = math.exp %159 : vector<2x64xf32>
    %cst_21 = arith.constant 1.000000e+00 : f32
    %161 = vector.broadcast %cst_21 : f32 to vector<2x64xf32>
    %162 = arith.addf %161, %160 : vector<2x64xf32>
    %163 = arith.divf %161, %162 : vector<2x64xf32>
    %164 = vector.extract_strided_slice %163 {offsets = [0, 0], sizes = [2, 32], strides = [1, 1]} : vector<2x64xf32> to vector<2x32xf32>
    %165 = vector.extract_strided_slice %163 {offsets = [0, 32], sizes = [2, 32], strides = [1, 1]} : vector<2x64xf32> to vector<2x32xf32>
    %166 = vector.extract_strided_slice %153 {offsets = [0, 64], sizes = [2, 32], strides = [1, 1]} : vector<2x96xf32> to vector<2x32xf32>
    %167 = vector.extract_strided_slice %155 {offsets = [0, 64], sizes = [2, 32], strides = [1, 1]} : vector<2x96xf32> to vector<2x32xf32>
    %168 = arith.addf %167, %6 : vector<2x32xf32>
    %169 = arith.mulf %164, %168 : vector<2x32xf32>
    %170 = arith.addf %166, %169 : vector<2x32xf32>
    %171 = math.tanh %170 : vector<2x32xf32>
    %172 = arith.subf %151, %171 : vector<2x32xf32>
    %173 = arith.mulf %165, %172 : vector<2x32xf32>
    %174 = arith.addf %171, %173 : vector<2x32xf32>
    %175 = vector.extract_strided_slice %13 {offsets = [0, 7, 0], sizes = [2, 1, 96], strides = [1, 1, 1]} : vector<2x8x96xf32> to vector<2x1x96xf32>
    %176 = vector.shape_cast %175 : vector<2x1x96xf32> to vector<2x96xf32>
    %177 = arith.truncf %174 : vector<2x32xf32> to vector<2x32xbf16>
    %cst_22 = arith.constant dense<0.000000e+00> : vector<2x96xf32>
    %178 = tpu.matmul %177, %1, %cst_22 {dimension_numbers = #tpu.dot_dimension_numbers<[1], [0], [0], [1], [0, 0, 1, 1], [], []>} : vector<2x32xbf16>, vector<32x96xbf16>, vector<2x96xf32> -> vector<2x96xf32>
    %179 = vector.extract_strided_slice %176 {offsets = [0, 0], sizes = [2, 64], strides = [1, 1]} : vector<2x96xf32> to vector<2x64xf32>
    %180 = vector.extract_strided_slice %178 {offsets = [0, 0], sizes = [2, 64], strides = [1, 1]} : vector<2x96xf32> to vector<2x64xf32>
    %181 = arith.addf %179, %180 : vector<2x64xf32>
    %182 = arith.negf %181 : vector<2x64xf32>
    %183 = math.exp %182 : vector<2x64xf32>
    %cst_23 = arith.constant 1.000000e+00 : f32
    %184 = vector.broadcast %cst_23 : f32 to vector<2x64xf32>
    %185 = arith.addf %184, %183 : vector<2x64xf32>
    %186 = arith.divf %184, %185 : vector<2x64xf32>
    %187 = vector.extract_strided_slice %186 {offsets = [0, 0], sizes = [2, 32], strides = [1, 1]} : vector<2x64xf32> to vector<2x32xf32>
    %188 = vector.extract_strided_slice %186 {offsets = [0, 32], sizes = [2, 32], strides = [1, 1]} : vector<2x64xf32> to vector<2x32xf32>
    %189 = vector.extract_strided_slice %176 {offsets = [0, 64], sizes = [2, 32], strides = [1, 1]} : vector<2x96xf32> to vector<2x32xf32>
    %190 = vector.extract_strided_slice %178 {offsets = [0, 64], sizes = [2, 32], strides = [1, 1]} : vector<2x96xf32> to vector<2x32xf32>
    %191 = arith.addf %190, %6 : vector<2x32xf32>
    %192 = arith.mulf %187, %191 : vector<2x32xf32>
    %193 = arith.addf %189, %192 : vector<2x32xf32>
    %194 = math.tanh %193 : vector<2x32xf32>
    %195 = arith.subf %174, %194 : vector<2x32xf32>
    %196 = arith.mulf %188, %195 : vector<2x32xf32>
    %197 = arith.addf %194, %196 : vector<2x32xf32>
    %c0_24 = arith.constant 0 : index
    %c0_25 = arith.constant 0 : index
    %198 = vector.load %arg3[%c0_24, %c0_25] : memref<2x32xf32, #tpu.memory_space<vmem>>, vector<2x32xf32>
    tpu.vector_store %arg3[%c0_24, %c0_25], %197 {strides = array<i32>} : memref<2x32xf32, #tpu.memory_space<vmem>>, vector<2x32xf32>,
    return
  }
}

</mosaic_0001>

<llo_original>
// kernel: tpu_custom_call.1
$region0: #{tpu_custom_call.1}
  #allocation0 [shape = 'u32[]', space=smem, size = 0x4, offset = 0x4, fixed_abs, tag = 'smem constant byte address 0x4 - core index']
  #allocation1 [shape = 'u32[144,128]{1,0:T(1,128)}', space=vmem, size = 0x12000, scoped, tag = 'internal scratch']
  %s0 = inlined_call_operand.hbm [shape: f32[2,8,32], index: 0, kind: input, shape index: {}]
  %s1 = inlined_call_operand.hbm [shape: bf16[64,96], index: 1, kind: input, shape index: {}]
  %s2 = inlined_call_operand.vmem [shape: f32[2,96], index: 2, kind: input, shape index: {}]
  %s3 = inlined_call_operand.hbm [shape: f32[2,32], index: 3, kind: output, shape index: {}]
  %s4 = sld [smem:[#allocation0]]
  $region30: #{tpu_custom_call.1} parent=0
    _
  %s6 = ssub.s32 1, %s4
  %s7 = scalar_select 0, %s6, %s4
  $region1: #{tpu_custom_call.1} parent=0
    #allocation2 [shape = 'u8[8192]{0}', space=vmem, size = 0x2000, scoped, tag = 'input window, operand 0, single buffered']
    #allocation3 [shape = 's32[1]{0}', space=sflag, size = 0x4, scoped, tag = 'scoped memory for tpu_custom_call.1']
    #allocation4 [shape = 's32[1]{0}', space=sflag, size = 0x4, scoped, tag = 'scoped memory for tpu_custom_call.1']
    #allocation5 [shape = 'u8[16384]{0}', space=vmem, size = 0x4000, scoped, tag = 'input window, operand 1, single buffered']
    #allocation6 [shape = 's32[1]{0}', space=sflag, size = 0x4, scoped, tag = 'scoped memory for tpu_custom_call.1']
    #allocation7 [shape = 'u8[1024]{0}', space=vmem, size = 0x400, scoped, tag = 'output window, operand 0, single buffered']
    %8 = vsyncpa [#allocation3], 0
    %9 = vsyncpa [#allocation6], 0
    %10 = vsyncpa [#allocation4], 0
    // Predicated region
    $region2: #{tpu_custom_call.1} parent=1 // pred_check
      _
    $region3: #{tpu_custom_call.1} parent=1 // pred_check_branch
      %12 = sbr.rel (0) target = $region5
    $region4: #{tpu_custom_call.1} parent=1 // pred_region
      %s14 = ssub.s32 256, 256
      %15 = vsyncadd [#allocation3], %s14
      %s16 = sshll.u32 [#allocation2], 4
      %s17 = int_to_ptr.vmem [resolvable:$true] %s16
      %22 = dma.hbm_to_vmem [thread:$0]  %s0, 256, %s17, [#allocation3], 128, 128, 8
    $region5: #{tpu_custom_call.1} parent=1 // pred_fallthru
      _
    // Predicated region
    $region6: #{tpu_custom_call.1} parent=1 // pred_check
      _
    $region7: #{tpu_custom_call.1} parent=1 // pred_check_branch
      %24 = sbr.rel (0) target = $region9
    $region8: #{tpu_custom_call.1} parent=1 // pred_region
      %s26 = ssub.s32 512, 512
      %27 = vsyncadd [#allocation6], %s26
      %s28 = sshll.u32 [#allocation5], 4
      %s29 = int_to_ptr.vmem [resolvable:$true] %s28
      %34 = dma.hbm_to_vmem [thread:$0]  %s1, 512, %s29, [#allocation6], 64, 64, 4
    $region9: #{tpu_custom_call.1} parent=1 // pred_fallthru
      _
    // Predicated region
    $region10: #{tpu_custom_call.1} parent=1 // pred_check
      _
    $region11: #{tpu_custom_call.1} parent=1 // pred_check_branch
      %36 = sbr.rel (0) target = $region13
    $region12: #{tpu_custom_call.1} parent=1 // pred_region
      _
    $region13: #{tpu_custom_call.1} parent=1 // pred_fallthru
      _
    // Predicated region
    $region14: #{tpu_custom_call.1} parent=1 // pred_check
      _
    $region15: #{tpu_custom_call.1} parent=1 // pred_check_branch
      %38 = sbr.rel (0) target = $region17
    $region16: #{tpu_custom_call.1} parent=1 // pred_region
      %39 = dma.done [#allocation3], 256
    $region17: #{tpu_custom_call.1} parent=1 // pred_fallthru
      _
    // Predicated region
    $region18: #{tpu_custom_call.1} parent=1 // pred_check
      _
    $region19: #{tpu_custom_call.1} parent=1 // pred_check_branch
      %41 = sbr.rel (0) target = $region21
    $region20: #{tpu_custom_call.1} parent=1 // pred_region
      %42 = dma.done [#allocation6], 512
    $region21: #{tpu_custom_call.1} parent=1 // pred_fallthru
      _
    %v44 = vld [vmem:[#allocation5] sm:$0xf]
    %v45 = vld [vmem:[#allocation5 + $0x4] sm:$0xf]
    %v46 = vld [vmem:[#allocation5 + $0x8] sm:$0xf]
    %v47 = vld [vmem:[#allocation5 + $0xc] sm:$0xf]
    %v48 = vld [vmem:[#allocation5 + $0x10] sm:$0xf]
    %v49 = vld [vmem:[#allocation5 + $0x14] sm:$0xf]
    %v50 = vld [vmem:[#allocation5 + $0x18] sm:$0xf]
    %v51 = vld [vmem:[#allocation5 + $0x1c] sm:$0xf]
    %v52 = vld [vmem:[%s2] sm:$0x3]
    %v53 = vlaneseq
    %v54 = vshrl.u32 %v53, 7
    %v55 = vsub.s32 1, %v54
    %v56 = vrot.slane %v52, %v55
    %v57 = vld [vmem:[#allocation2] sm:$0xff]
    %v58 = vld [vmem:[#allocation2 + $0x8] sm:$0xff]
    %v59 = vpack.c.bf16 %v57, %v57
    %v60 = vpack.c.bf16 %v58, %v58
    %v61 = vlaneseq
    %v62 = vshrl.u32 %v61, 7
    %v63 = vsub.s32 0, %v62
    %v64 = vrot.slane %v52, %v63
    %v67 = vunpack.c.l.b16 %v59
    %v68 = vunpack.c.l.b16 %v60
    %v69 = vpack.c.b16 %v68, %v67
    %v74 = vunpack.c.l.b16 %v44
    %v75 = vunpack.c.l.b16 %v45
    %v76 = vunpack.c.l.b16 %v46
    %v77 = vunpack.c.l.b16 %v47
    %v78 = vpack.c.b16 %v75, %v74
    %v79 = vpack.c.b16 %v77, %v76
    %vm82 = vcmask 261120
    %v84 = vsel %vm82, %v69, 0
    %86 = vmatprep.subr.bf16.mxu0 0
    %87 = vmatpush1.bf16.msra.mxu0 %v78
    %88 = vmatprep.subr.bf16.mxu0 0
    %89 = vmatpush1.bf16.msra.mxu0 %v79
    %90 = vmatprep.subr.bf16.mxu0 0
    %91 = vmatpush1.bf16.msra.mxu0 0
    %92 = vmatprep.subr.bf16.mxu0 0
    %93 = vmatpush1.bf16.msra.mxu0 0
    %94 = vmatprep.subr.bf16.mxu0 0
    %95 = vmatpush1.bf16.msra.mxu0 0
    %96 = vmatprep.subr.bf16.mxu0 0
    %97 = vmatpush1.bf16.msra.mxu0 0
    %98 = vmatprep.subr.bf16.mxu0 0
    %99 = vmatpush1.bf16.msra.mxu0 0
    %100 = vmatprep.subr.bf16.mxu0 0
    %101 = vmatpush1.bf16.msra.mxu0 0
    %102 = vmatprep.subr.bf16.mxu0 0
    %103 = vmatpush1.bf16.msra.mxu0 0
    %104 = vmatprep.subr.bf16.mxu0 0
    %105 = vmatpush1.bf16.msra.mxu0 0
    %106 = vmatprep.subr.bf16.mxu0 0
    %107 = vmatpush1.bf16.msra.mxu0 0
    %108 = vmatprep.subr.bf16.mxu0 0
    %109 = vmatpush1.bf16.msra.mxu0 0
    %110 = vmatprep.subr.bf16.mxu0 0
    %111 = vmatpush1.bf16.msra.mxu0 0
    %112 = vmatprep.subr.bf16.mxu0 0
    %113 = vmatpush1.bf16.msra.mxu0 0
    %114 = vmatprep.subr.bf16.mxu0 0
    %115 = vmatpush1.bf16.msra.mxu0 0
    %116 = vmatprep.subr.bf16.mxu0 0
    %117 = vmatpush1.bf16.msra.mxu0 0
    %118 = vmatprep.mubr.bf16.mxu0 0
    %119 = vmatmul.mubr.bf16.gmra.mrb[0].mxu0 %v84
    %v120 = vpop.f32.mrb[0].mxu0
    %v121 = vadd.f32 %v64, %v120
    %v122 = vpop.f32.mrb[0].mxu0
    %v123 = vpop.f32.mrb[0].mxu0
    %v124 = vadd.f32 %v64, %v123
    %v125 = vpop.f32.mrb[0].mxu0
    %126 = vdwg.mxu0
    %v127 = vadd.f32 %v121, 0.0
    %v128 = vadd.f32 %v124, 0.0
    %v129 = vxor.u32 %v127, 2147483648
    %v130 = vxor.u32 %v128, 2147483648
    %v131 = vmul.f32 %v129, 1.442695
    %v132 = vpow.pop %v131
    %v133 = vmul.f32 %v130, 1.442695
    %v134 = vpow.pop %v133
    %v135 = vadd.f32 %v132, 1.0
    %v136 = vadd.f32 %v134, 1.0
    %v137 = vrcp.pop %v135
    %v138 = vmul.f32 1.0, %v137
    %v139 = vrcp.pop %v136
    %v140 = vmul.f32 1.0, %v139
    %v141 = vadd.f32 %v56, 0.0
    %v142 = vmul.f32 %v138, %v141
    %v143 = vmul.f32 %v140, %v141
    %146 = vrot.lane.b32.xlu0 %v142, 64
    %v147 = vpop.permute.xlu0 %146
    %148 = vrot.lane.b32.xlu0 %v143, 64
    %v149 = vpop.permute.xlu0 %148
    %v152 = vadd.f32 %v121, %v147
    %v153 = vadd.f32 %v124, %v149
    %v154 = vtanh.pop %v152
    %v155 = vtanh.pop %v153
    %v156 = vsub.f32 0.0, %v154
    %v157 = vsub.f32 0.0, %v155
    %160 = vrot.lane.b32.xlu0 %v156, 96
    %v161 = vpop.permute.xlu0 %160
    %162 = vrot.lane.b32.xlu0 %v157, 96
    %v163 = vpop.permute.xlu0 %162
    %v166 = vmul.f32 %v138, %v161
    %v167 = vmul.f32 %v140, %v163
    %170 = vrot.lane.b32.xlu0 %v166, 32
    %v171 = vpop.permute.xlu0 %170
    %172 = vrot.lane.b32.xlu0 %v167, 32
    %v173 = vpop.permute.xlu0 %172
    %v176 = vadd.f32 %v154, %v171
    %v177 = vadd.f32 %v155, %v173
    %v178 = vpack.c.bf16 %v176, %v176
    %v179 = vpack.c.bf16 %v177, %v177
    %v182 = vunpack.c.l.b16 %v178
    %v183 = vunpack.c.l.b16 %v179
    %v184 = vrot.slane %v183, 7
    %vm185 = vcmask 1041409
    %v186 = vsel %vm185, %v184, %v182
    %v187 = vpack.c.b16 %v186, %v186
    %188 = vrot.lane.b32.xlu0 %v187, 64
    %v189 = vpop.permute.xlu0 %188
    %v194 = vunpack.c.l.b16 %v48
    %v195 = vunpack.c.l.b16 %v49
    %v196 = vunpack.c.l.b16 %v50
    %v197 = vunpack.c.l.b16 %v51
    %v198 = vpack.c.b16 %v195, %v194
    %v199 = vpack.c.b16 %v197, %v196
    %v203 = vsel %vm82, %v189, 0
    %205 = vmatprep.subr.bf16.mxu0 0
    %206 = vmatpush1.bf16.msra.mxu0 %v198
    %207 = vmatprep.subr.bf16.mxu0 0
    %208 = vmatpush1.bf16.msra.mxu0 %v199
    %209 = vmatprep.subr.bf16.mxu0 0
    %210 = vmatpush1.bf16.msra.mxu0 0
    %211 = vmatprep.subr.bf16.mxu0 0
    %212 = vmatpush1.bf16.msra.mxu0 0
    %213 = vmatprep.subr.bf16.mxu0 0
    %214 = vmatpush1.bf16.msra.mxu0 0
    %215 = vmatprep.subr.bf16.mxu0 0
    %216 = vmatpush1.bf16.msra.mxu0 0
    %217 = vmatprep.subr.bf16.mxu0 0
    %218 = vmatpush1.bf16.msra.mxu0 0
    %219 = vmatprep.subr.bf16.mxu0 0
    %220 = vmatpush1.bf16.msra.mxu0 0
    %221 = vmatprep.subr.bf16.mxu0 0
    %222 = vmatpush1.bf16.msra.mxu0 0
    %223 = vmatprep.subr.bf16.mxu0 0
    %224 = vmatpush1.bf16.msra.mxu0 0
    %225 = vmatprep.subr.bf16.mxu0 0
    %226 = vmatpush1.bf16.msra.mxu0 0
    %227 = vmatprep.subr.bf16.mxu0 0
    %228 = vmatpush1.bf16.msra.mxu0 0
    %229 = vmatprep.subr.bf16.mxu0 0
    %230 = vmatpush1.bf16.msra.mxu0 0
    %231 = vmatprep.subr.bf16.mxu0 0
    %232 = vmatpush1.bf16.msra.mxu0 0
    %233 = vmatprep.subr.bf16.mxu0 0
    %234 = vmatpush1.bf16.msra.mxu0 0
    %235 = vmatprep.subr.bf16.mxu0 0
    %236 = vmatpush1.bf16.msra.mxu0 0
    %237 = vmatprep.mubr.bf16.mxu0 0
    %238 = vmatmul.mubr.bf16.gmra.mrb[0].mxu0 %v203
    %v239 = vpop.f32.mrb[0].mxu0
    %v240 = vadd.f32 0.0, %v239
    %v241 = vpop.f32.mrb[0].mxu0
    %v242 = vpop.f32.mrb[0].mxu0
    %v243 = vpop.f32.mrb[0].mxu0
    %244 = vdwg.mxu0
    %v246 = vrot.slane %v240, 7
    %v249 = vadd.f32 %v121, %v246
    %v250 = vadd.f32 %v124, %v240
    %v251 = vxor.u32 %v249, 2147483648
    %v252 = vxor.u32 %v250, 2147483648
    %v253 = vmul.f32 %v251, 1.442695
    %v254 = vpow.pop %v253
    %v255 = vmul.f32 %v252, 1.442695
    %v256 = vpow.pop %v255
    %v257 = vadd.f32 %v254, 1.0
    %v258 = vadd.f32 %v256, 1.0
    %v259 = vrcp.pop %v257
    %v260 = vmul.f32 1.0, %v259
    %v261 = vrcp.pop %v258
    %v262 = vmul.f32 1.0, %v261
    %264 = vrot.lane.b32.xlu0 %v56, 64
    %v265 = vpop.permute.xlu0 %264
    %v267 = vadd.f32 %v240, %v265
    %v269 = vrot.slane %v267, 7
    %270 = vrot.lane.b32.xlu0 %v269, 64
    %v271 = vpop.permute.xlu0 %270
    %272 = vrot.lane.b32.xlu0 %v267, 64
    %v273 = vpop.permute.xlu0 %272
    %v276 = vmul.f32 %v260, %v271
    %v277 = vmul.f32 %v262, %v273
    %280 = vrot.lane.b32.xlu0 %v276, 64
    %v281 = vpop.permute.xlu0 %280
    %282 = vrot.lane.b32.xlu0 %v277, 64
    %v283 = vpop.permute.xlu0 %282
    %v286 = vadd.f32 %v121, %v281
    %v287 = vadd.f32 %v124, %v283
    %v288 = vtanh.pop %v286
    %v289 = vtanh.pop %v287
    %v292 = vrot.slane %v288, 1
    %v293 = vrot.slane %v289, 1
    %v296 = vsub.f32 %v176, %v292
    %v297 = vsub.f32 %v177, %v293
    %v300 = vrot.slane %v296, 7
    %v301 = vrot.slane %v297, 7
    %302 = vrot.lane.b32.xlu0 %v300, 96
    %v303 = vpop.permute.xlu0 %302
    %304 = vrot.lane.b32.xlu0 %v301, 96
    %v305 = vpop.permute.xlu0 %304
    %v308 = vmul.f32 %v260, %v303
    %v309 = vmul.f32 %v262, %v305
    %312 = vrot.lane.b32.xlu0 %v308, 32
    %v313 = vpop.permute.xlu0 %312
    %314 = vrot.lane.b32.xlu0 %v309, 32
    %v315 = vpop.permute.xlu0 %314
    %v318 = vadd.f32 %v288, %v313
    %v319 = vadd.f32 %v289, %v315
    %v320 = vpack.c.bf16 %v318, %v318
    %v321 = vpack.c.bf16 %v319, %v319
    %v324 = vunpack.c.l.b16 %v320
    %v325 = vunpack.c.l.b16 %v321
    %v326 = vrot.slane %v324, 1
    %v327 = vsel %vm185, %v325, %v326
    %v328 = vpack.c.b16 %v327, %v327
    %329 = vrot.lane.b32.xlu0 %v328, 64
    %v330 = vpop.permute.xlu0 %329
    %v332 = vsel %vm82, %v330, 0
    %334 = vmatprep.subr.bf16.mxu0 0
    %335 = vmatpush1.bf16.msra.mxu0 %v198
    %336 = vmatprep.subr.bf16.mxu0 0
    %337 = vmatpush1.bf16.msra.mxu0 %v199
    %338 = vmatprep.subr.bf16.mxu0 0
    %339 = vmatpush1.bf16.msra.mxu0 0
    %340 = vmatprep.subr.bf16.mxu0 0
    %341 = vmatpush1.bf16.msra.mxu0 0
    %342 = vmatprep.subr.bf16.mxu0 0
    %343 = vmatpush1.bf16.msra.mxu0 0
    %344 = vmatprep.subr.bf16.mxu0 0
    %345 = vmatpush1.bf16.msra.mxu0 0
    %346 = vmatprep.subr.bf16.mxu0 0
    %347 = vmatpush1.bf16.msra.mxu0 0
    %348 = vmatprep.subr.bf16.mxu0 0
    %349 = vmatpush1.bf16.msra.mxu0 0
    %350 = vmatprep.subr.bf16.mxu0 0
    %351 = vmatpush1.bf16.msra.mxu0 0
    %352 = vmatprep.subr.bf16.mxu0 0
    %353 = vmatpush1.bf16.msra.mxu0 0
    %354 = vmatprep.subr.bf16.mxu0 0
    %355 = vmatpush1.bf16.msra.mxu0 0
    %356 = vmatprep.subr.bf16.mxu0 0
    %357 = vmatpush1.bf16.msra.mxu0 0
    %358 = vmatprep.subr.bf16.mxu0 0
    %359 = vmatpush1.bf16.msra.mxu0 0
    %360 = vmatprep.subr.bf16.mxu0 0
    %361 = vmatpush1.bf16.msra.mxu0 0
    %362 = vmatprep.subr.bf16.mxu0 0
    %363 = vmatpush1.bf16.msra.mxu0 0
    %364 = vmatprep.subr.bf16.mxu0 0
    %365 = vmatpush1.bf16.msra.mxu0 0
    %366 = vmatprep.mubr.bf16.mxu0 0
    %367 = vmatmul.mubr.bf16.gmra.mrb[0].mxu0 %v332
    %v368 = vpop.f32.mrb[0].mxu0
    %v369 = vadd.f32 0.0, %v368
    %v370 = vpop.f32.mrb[0].mxu0
    %v371 = vpop.f32.mrb[0].mxu0
    %v372 = vpop.f32.mrb[0].mxu0
    %373 = vdwg.mxu0
    %v375 = vrot.slane %v369, 6
    %v376 = vrot.slane %v369, 7
    %v379 = vadd.f32 %v121, %v375
    %v380 = vadd.f32 %v124, %v376
    %v381 = vxor.u32 %v379, 2147483648
    %v382 = vxor.u32 %v380, 2147483648
    %v383 = vmul.f32 %v381, 1.442695
    %v384 = vpow.pop %v383
    %v385 = vmul.f32 %v382, 1.442695
    %v386 = vpow.pop %v385
    %v387 = vadd.f32 %v384, 1.0
    %v388 = vadd.f32 %v386, 1.0
    %v389 = vrcp.pop %v387
    %v390 = vmul.f32 1.0, %v389
    %v391 = vrcp.pop %v388
    %v392 = vmul.f32 1.0, %v391
    %v393 = vadd.f32 %v369, %v265
    %v395 = vrot.slane %v393, 6
    %v396 = vrot.slane %v393, 7
    %397 = vrot.lane.b32.xlu0 %v395, 64
    %v398 = vpop.permute.xlu0 %397
    %399 = vrot.lane.b32.xlu0 %v396, 64
    %v400 = vpop.permute.xlu0 %399
    %v403 = vmul.f32 %v390, %v398
    %v404 = vmul.f32 %v392, %v400
    %407 = vrot.lane.b32.xlu0 %v403, 64
    %v408 = vpop.permute.xlu0 %407
    %409 = vrot.lane.b32.xlu0 %v404, 64
    %v410 = vpop.permute.xlu0 %409
    %v413 = vadd.f32 %v121, %v408
    %v414 = vadd.f32 %v124, %v410
    %v415 = vtanh.pop %v413
    %v416 = vtanh.pop %v414
    %v419 = vrot.slane %v415, 1
    %v420 = vrot.slane %v416, 1
    %v423 = vsub.f32 %v318, %v419
    %v424 = vsub.f32 %v319, %v420
    %v427 = vrot.slane %v423, 7
    %v428 = vrot.slane %v424, 7
    %429 = vrot.lane.b32.xlu0 %v427, 96
    %v430 = vpop.permute.xlu0 %429
    %431 = vrot.lane.b32.xlu0 %v428, 96
    %v432 = vpop.permute.xlu0 %431
    %v435 = vmul.f32 %v390, %v430
    %v436 = vmul.f32 %v392, %v432
    %439 = vrot.lane.b32.xlu0 %v435, 32
    %v440 = vpop.permute.xlu0 %439
    %441 = vrot.lane.b32.xlu0 %v436, 32
    %v442 = vpop.permute.xlu0 %441
    %v445 = vadd.f32 %v415, %v440
    %v446 = vadd.f32 %v416, %v442
    %v447 = vpack.c.bf16 %v445, %v445
    %v448 = vpack.c.bf16 %v446, %v446
    %v451 = vunpack.c.l.b16 %v447
    %v452 = vunpack.c.l.b16 %v448
    %v453 = vrot.slane %v451, 2
    %v454 = vrot.slane %v452, 1
    %v455 = vsel %vm185, %v454, %v453
    %v456 = vpack.c.b16 %v455, %v455
    %457 = vrot.lane.b32.xlu0 %v456, 64
    %v458 = vpop.permute.xlu0 %457
    %v460 = vsel %vm82, %v458, 0
    %462 = vmatprep.subr.bf16.mxu0 0
    %463 = vmatpush1.bf16.msra.mxu0 %v198
    %464 = vmatprep.subr.bf16.mxu0 0
    %465 = vmatpush1.bf16.msra.mxu0 %v199
    %466 = vmatprep.subr.bf16.mxu0 0
    %467 = vmatpush1.bf16.msra.mxu0 0
    %468 = vmatprep.subr.bf16.mxu0 0
    %469 = vmatpush1.bf16.msra.mxu0 0
    %470 = vmatprep.subr.bf16.mxu0 0
    %471 = vmatpush1.bf16.msra.mxu0 0
    %472 = vmatprep.subr.bf16.mxu0 0
    %473 = vmatpush1.bf16.msra.mxu0 0
    %474 = vmatprep.subr.bf16.mxu0 0
    %475 = vmatpush1.bf16.msra.mxu0 0
    %476 = vmatprep.subr.bf16.mxu0 0
    %477 = vmatpush1.bf16.msra.mxu0 0
    %478 = vmatprep.subr.bf16.mxu0 0
    %479 = vmatpush1.bf16.msra.mxu0 0
    %480 = vmatprep.subr.bf16.mxu0 0
    %481 = vmatpush1.bf16.msra.mxu0 0
    %482 = vmatprep.subr.bf16.mxu0 0
    %483 = vmatpush1.bf16.msra.mxu0 0
    %484 = vmatprep.subr.bf16.mxu0 0
    %485 = vmatpush1.bf16.msra.mxu0 0
    %486 = vmatprep.subr.bf16.mxu0 0
    %487 = vmatpush1.bf16.msra.mxu0 0
    %488 = vmatprep.subr.bf16.mxu0 0
    %489 = vmatpush1.bf16.msra.mxu0 0
    %490 = vmatprep.subr.bf16.mxu0 0
    %491 = vmatpush1.bf16.msra.mxu0 0
    %492 = vmatprep.subr.bf16.mxu0 0
    %493 = vmatpush1.bf16.msra.mxu0 0
    %494 = vmatprep.mubr.bf16.mxu0 0
    %495 = vmatmul.mubr.bf16.gmra.mrb[0].mxu0 %v460
    %v496 = vpop.f32.mrb[0].mxu0
    %v497 = vadd.f32 0.0, %v496
    %v498 = vpop.f32.mrb[0].mxu0
    %v499 = vpop.f32.mrb[0].mxu0
    %v500 = vpop.f32.mrb[0].mxu0
    %501 = vdwg.mxu0
    %v503 = vrot.slane %v497, 5
    %v504 = vrot.slane %v497, 6
    %v507 = vadd.f32 %v121, %v503
    %v508 = vadd.f32 %v124, %v504
    %v509 = vxor.u32 %v507, 2147483648
    %v510 = vxor.u32 %v508, 2147483648
    %v511 = vmul.f32 %v509, 1.442695
    %v512 = vpow.pop %v511
    %v513 = vmul.f32 %v510, 1.442695
    %v514 = vpow.pop %v513
    %v515 = vadd.f32 %v512, 1.0
    %v516 = vadd.f32 %v514, 1.0
    %v517 = vrcp.pop %v515
    %v518 = vmul.f32 1.0, %v517
    %v519 = vrcp.pop %v516
    %v520 = vmul.f32 1.0, %v519
    %v521 = vadd.f32 %v497, %v265
    %v523 = vrot.slane %v521, 5
    %v524 = vrot.slane %v521, 6
    %525 = vrot.lane.b32.xlu0 %v523, 64
    %v526 = vpop.permute.xlu0 %525
    %527 = vrot.lane.b32.xlu0 %v524, 64
    %v528 = vpop.permute.xlu0 %527
    %v531 = vmul.f32 %v518, %v526
    %v532 = vmul.f32 %v520, %v528
    %535 = vrot.lane.b32.xlu0 %v531, 64
    %v536 = vpop.permute.xlu0 %535
    %537 = vrot.lane.b32.xlu0 %v532, 64
    %v538 = vpop.permute.xlu0 %537
    %v541 = vadd.f32 %v121, %v536
    %v542 = vadd.f32 %v124, %v538
    %v543 = vtanh.pop %v541
    %v544 = vtanh.pop %v542
    %v547 = vrot.slane %v543, 1
    %v548 = vrot.slane %v544, 1
    %v551 = vsub.f32 %v445, %v547
    %v552 = vsub.f32 %v446, %v548
    %v555 = vrot.slane %v551, 7
    %v556 = vrot.slane %v552, 7
    %557 = vrot.lane.b32.xlu0 %v555, 96
    %v558 = vpop.permute.xlu0 %557
    %559 = vrot.lane.b32.xlu0 %v556, 96
    %v560 = vpop.permute.xlu0 %559
    %v563 = vmul.f32 %v518, %v558
    %v564 = vmul.f32 %v520, %v560
    %567 = vrot.lane.b32.xlu0 %v563, 32
    %v568 = vpop.permute.xlu0 %567
    %569 = vrot.lane.b32.xlu0 %v564, 32
    %v570 = vpop.permute.xlu0 %569
    %v573 = vadd.f32 %v543, %v568
    %v574 = vadd.f32 %v544, %v570
    %v575 = vpack.c.bf16 %v573, %v573
    %v576 = vpack.c.bf16 %v574, %v574
    %v579 = vunpack.c.l.b16 %v575
    %v580 = vunpack.c.l.b16 %v576
    %v581 = vrot.slane %v579, 3
    %v582 = vrot.slane %v580, 2
    %v583 = vsel %vm185, %v582, %v581
    %v584 = vpack.c.b16 %v583, %v583
    %585 = vrot.lane.b32.xlu0 %v584, 64
    %v586 = vpop.permute.xlu0 %585
    %v588 = vsel %vm82, %v586, 0
    %590 = vmatprep.subr.bf16.mxu0 0
    %591 = vmatpush1.bf16.msra.mxu0 %v198
    %592 = vmatprep.subr.bf16.mxu0 0
    %593 = vmatpush1.bf16.msra.mxu0 %v199
    %594 = vmatprep.subr.bf16.mxu0 0
    %595 = vmatpush1.bf16.msra.mxu0 0
    %596 = vmatprep.subr.bf16.mxu0 0
    %597 = vmatpush1.bf16.msra.mxu0 0
    %598 = vmatprep.subr.bf16.mxu0 0
    %599 = vmatpush1.bf16.msra.mxu0 0
    %600 = vmatprep.subr.bf16.mxu0 0
    %601 = vmatpush1.bf16.msra.mxu0 0
    %602 = vmatprep.subr.bf16.mxu0 0
    %603 = vmatpush1.bf16.msra.mxu0 0
    %604 = vmatprep.subr.bf16.mxu0 0
    %605 = vmatpush1.bf16.msra.mxu0 0
    %606 = vmatprep.subr.bf16.mxu0 0
    %607 = vmatpush1.bf16.msra.mxu0 0
    %608 = vmatprep.subr.bf16.mxu0 0
    %609 = vmatpush1.bf16.msra.mxu0 0
    %610 = vmatprep.subr.bf16.mxu0 0
    %611 = vmatpush1.bf16.msra.mxu0 0
    %612 = vmatprep.subr.bf16.mxu0 0
    %613 = vmatpush1.bf16.msra.mxu0 0
    %614 = vmatprep.subr.bf16.mxu0 0
    %615 = vmatpush1.bf16.msra.mxu0 0
    %616 = vmatprep.subr.bf16.mxu0 0
    %617 = vmatpush1.bf16.msra.mxu0 0
    %618 = vmatprep.subr.bf16.mxu0 0
    %619 = vmatpush1.bf16.msra.mxu0 0
    %620 = vmatprep.subr.bf16.mxu0 0
    %621 = vmatpush1.bf16.msra.mxu0 0
    %622 = vmatprep.mubr.bf16.mxu0 0
    %623 = vmatmul.mubr.bf16.gmra.mrb[0].mxu0 %v588
    %v624 = vpop.f32.mrb[0].mxu0
    %v625 = vadd.f32 0.0, %v624
    %v626 = vpop.f32.mrb[0].mxu0
    %v627 = vpop.f32.mrb[0].mxu0
    %v628 = vpop.f32.mrb[0].mxu0
    %629 = vdwg.mxu0
    %v631 = vrot.slane %v625, 4
    %v632 = vrot.slane %v625, 5
    %v635 = vadd.f32 %v121, %v631
    %v636 = vadd.f32 %v124, %v632
    %v637 = vxor.u32 %v635, 2147483648
    %v638 = vxor.u32 %v636, 2147483648
    %v639 = vmul.f32 %v637, 1.442695
    %v640 = vpow.pop %v639
    %v641 = vmul.f32 %v638, 1.442695
    %v642 = vpow.pop %v641
    %v643 = vadd.f32 %v640, 1.0
    %v644 = vadd.f32 %v642, 1.0
    %v645 = vrcp.pop %v643
    %v646 = vmul.f32 1.0, %v645
    %v647 = vrcp.pop %v644
    %v648 = vmul.f32 1.0, %v647
    %v649 = vadd.f32 %v625, %v265
    %v651 = vrot.slane %v649, 4
    %v652 = vrot.slane %v649, 5
    %653 = vrot.lane.b32.xlu0 %v651, 64
    %v654 = vpop.permute.xlu0 %653
    %655 = vrot.lane.b32.xlu0 %v652, 64
    %v656 = vpop.permute.xlu0 %655
    %v659 = vmul.f32 %v646, %v654
    %v660 = vmul.f32 %v648, %v656
    %663 = vrot.lane.b32.xlu0 %v659, 64
    %v664 = vpop.permute.xlu0 %663
    %665 = vrot.lane.b32.xlu0 %v660, 64
    %v666 = vpop.permute.xlu0 %665
    %v669 = vadd.f32 %v121, %v664
    %v670 = vadd.f32 %v124, %v666
    %v671 = vtanh.pop %v669
    %v672 = vtanh.pop %v670
    %v675 = vrot.slane %v671, 1
    %v676 = vrot.slane %v672, 1
    %v679 = vsub.f32 %v573, %v675
    %v680 = vsub.f32 %v574, %v676
    %v683 = vrot.slane %v679, 7
    %v684 = vrot.slane %v680, 7
    %685 = vrot.lane.b32.xlu0 %v683, 96
    %v686 = vpop.permute.xlu0 %685
    %687 = vrot.lane.b32.xlu0 %v684, 96
    %v688 = vpop.permute.xlu0 %687
    %v691 = vmul.f32 %v646, %v686
    %v692 = vmul.f32 %v648, %v688
    %695 = vrot.lane.b32.xlu0 %v691, 32
    %v696 = vpop.permute.xlu0 %695
    %697 = vrot.lane.b32.xlu0 %v692, 32
    %v698 = vpop.permute.xlu0 %697
    %v701 = vadd.f32 %v671, %v696
    %v702 = vadd.f32 %v672, %v698
    %v703 = vpack.c.bf16 %v701, %v701
    %v704 = vpack.c.bf16 %v702, %v702
    %v707 = vunpack.c.l.b16 %v703
    %v708 = vunpack.c.l.b16 %v704
    %v709 = vrot.slane %v707, 4
    %v710 = vrot.slane %v708, 3
    %v711 = vsel %vm185, %v710, %v709
    %v712 = vpack.c.b16 %v711, %v711
    %713 = vrot.lane.b32.xlu0 %v712, 64
    %v714 = vpop.permute.xlu0 %713
    %v716 = vsel %vm82, %v714, 0
    %718 = vmatprep.subr.bf16.mxu0 0
    %719 = vmatpush1.bf16.msra.mxu0 %v198
    %720 = vmatprep.subr.bf16.mxu0 0
    %721 = vmatpush1.bf16.msra.mxu0 %v199
    %722 = vmatprep.subr.bf16.mxu0 0
    %723 = vmatpush1.bf16.msra.mxu0 0
    %724 = vmatprep.subr.bf16.mxu0 0
    %725 = vmatpush1.bf16.msra.mxu0 0
    %726 = vmatprep.subr.bf16.mxu0 0
    %727 = vmatpush1.bf16.msra.mxu0 0
    %728 = vmatprep.subr.bf16.mxu0 0
    %729 = vmatpush1.bf16.msra.mxu0 0
    %730 = vmatprep.subr.bf16.mxu0 0
    %731 = vmatpush1.bf16.msra.mxu0 0
    %732 = vmatprep.subr.bf16.mxu0 0
    %733 = vmatpush1.bf16.msra.mxu0 0
    %734 = vmatprep.subr.bf16.mxu0 0
    %735 = vmatpush1.bf16.msra.mxu0 0
    %736 = vmatprep.subr.bf16.mxu0 0
    %737 = vmatpush1.bf16.msra.mxu0 0
    %738 = vmatprep.subr.bf16.mxu0 0
    %739 = vmatpush1.bf16.msra.mxu0 0
    %740 = vmatprep.subr.bf16.mxu0 0
    %741 = vmatpush1.bf16.msra.mxu0 0
    %742 = vmatprep.subr.bf16.mxu0 0
    %743 = vmatpush1.bf16.msra.mxu0 0
    %744 = vmatprep.subr.bf16.mxu0 0
    %745 = vmatpush1.bf16.msra.mxu0 0
    %746 = vmatprep.subr.bf16.mxu0 0
    %747 = vmatpush1.bf16.msra.mxu0 0
    %748 = vmatprep.subr.bf16.mxu0 0
    %749 = vmatpush1.bf16.msra.mxu0 0
    %750 = vmatprep.mubr.bf16.mxu0 0
    %751 = vmatmul.mubr.bf16.gmra.mrb[0].mxu0 %v716
    %v752 = vpop.f32.mrb[0].mxu0
    %v753 = vadd.f32 0.0, %v752
    %v754 = vpop.f32.mrb[0].mxu0
    %v755 = vpop.f32.mrb[0].mxu0
    %v756 = vpop.f32.mrb[0].mxu0
    %757 = vdwg.mxu0
    %v759 = vrot.slane %v753, 3
    %v760 = vrot.slane %v753, 4
    %v763 = vadd.f32 %v121, %v759
    %v764 = vadd.f32 %v124, %v760
    %v765 = vxor.u32 %v763, 2147483648
    %v766 = vxor.u32 %v764, 2147483648
    %v767 = vmul.f32 %v765, 1.442695
    %v768 = vpow.pop %v767
    %v769 = vmul.f32 %v766, 1.442695
    %v770 = vpow.pop %v769
    %v771 = vadd.f32 %v768, 1.0
    %v772 = vadd.f32 %v770, 1.0
    %v773 = vrcp.pop %v771
    %v774 = vmul.f32 1.0, %v773
    %v775 = vrcp.pop %v772
    %v776 = vmul.f32 1.0, %v775
    %v777 = vadd.f32 %v753, %v265
    %v779 = vrot.slane %v777, 3
    %v780 = vrot.slane %v777, 4
    %781 = vrot.lane.b32.xlu0 %v779, 64
    %v782 = vpop.permute.xlu0 %781
    %783 = vrot.lane.b32.xlu0 %v780, 64
    %v784 = vpop.permute.xlu0 %783
    %v787 = vmul.f32 %v774, %v782
    %v788 = vmul.f32 %v776, %v784
    %791 = vrot.lane.b32.xlu0 %v787, 64
    %v792 = vpop.permute.xlu0 %791
    %793 = vrot.lane.b32.xlu0 %v788, 64
    %v794 = vpop.permute.xlu0 %793
    %v797 = vadd.f32 %v121, %v792
    %v798 = vadd.f32 %v124, %v794
    %v799 = vtanh.pop %v797
    %v800 = vtanh.pop %v798
    %v803 = vrot.slane %v799, 1
    %v804 = vrot.slane %v800, 1
    %v807 = vsub.f32 %v701, %v803
    %v808 = vsub.f32 %v702, %v804
    %v811 = vrot.slane %v807, 7
    %v812 = vrot.slane %v808, 7
    %813 = vrot.lane.b32.xlu0 %v811, 96
    %v814 = vpop.permute.xlu0 %813
    %815 = vrot.lane.b32.xlu0 %v812, 96
    %v816 = vpop.permute.xlu0 %815
    %v819 = vmul.f32 %v774, %v814
    %v820 = vmul.f32 %v776, %v816
    %823 = vrot.lane.b32.xlu0 %v819, 32
    %v824 = vpop.permute.xlu0 %823
    %825 = vrot.lane.b32.xlu0 %v820, 32
    %v826 = vpop.permute.xlu0 %825
    %v829 = vadd.f32 %v799, %v824
    %v830 = vadd.f32 %v800, %v826
    %v831 = vpack.c.bf16 %v829, %v829
    %v832 = vpack.c.bf16 %v830, %v830
    %v835 = vunpack.c.l.b16 %v831
    %v836 = vunpack.c.l.b16 %v832
    %v837 = vrot.slane %v835, 5
    %v838 = vrot.slane %v836, 4
    %v839 = vsel %vm185, %v838, %v837
    %v840 = vpack.c.b16 %v839, %v839
    %841 = vrot.lane.b32.xlu0 %v840, 64
    %v842 = vpop.permute.xlu0 %841
    %v844 = vsel %vm82, %v842, 0
    %846 = vmatprep.subr.bf16.mxu0 0
    %847 = vmatpush1.bf16.msra.mxu0 %v198
    %848 = vmatprep.subr.bf16.mxu0 0
    %849 = vmatpush1.bf16.msra.mxu0 %v199
    %850 = vmatprep.subr.bf16.mxu0 0
    %851 = vmatpush1.bf16.msra.mxu0 0
    %852 = vmatprep.subr.bf16.mxu0 0
    %853 = vmatpush1.bf16.msra.mxu0 0
    %854 = vmatprep.subr.bf16.mxu0 0
    %855 = vmatpush1.bf16.msra.mxu0 0
    %856 = vmatprep.subr.bf16.mxu0 0
    %857 = vmatpush1.bf16.msra.mxu0 0
    %858 = vmatprep.subr.bf16.mxu0 0
    %859 = vmatpush1.bf16.msra.mxu0 0
    %860 = vmatprep.subr.bf16.mxu0 0
    %861 = vmatpush1.bf16.msra.mxu0 0
    %862 = vmatprep.subr.bf16.mxu0 0
    %863 = vmatpush1.bf16.msra.mxu0 0
    %864 = vmatprep.subr.bf16.mxu0 0
    %865 = vmatpush1.bf16.msra.mxu0 0
    %866 = vmatprep.subr.bf16.mxu0 0
    %867 = vmatpush1.bf16.msra.mxu0 0
    %868 = vmatprep.subr.bf16.mxu0 0
    %869 = vmatpush1.bf16.msra.mxu0 0
    %870 = vmatprep.subr.bf16.mxu0 0
    %871 = vmatpush1.bf16.msra.mxu0 0
    %872 = vmatprep.subr.bf16.mxu0 0
    %873 = vmatpush1.bf16.msra.mxu0 0
    %874 = vmatprep.subr.bf16.mxu0 0
    %875 = vmatpush1.bf16.msra.mxu0 0
    %876 = vmatprep.subr.bf16.mxu0 0
    %877 = vmatpush1.bf16.msra.mxu0 0
    %878 = vmatprep.mubr.bf16.mxu0 0
    %879 = vmatmul.mubr.bf16.gmra.mrb[0].mxu0 %v844
    %v880 = vpop.f32.mrb[0].mxu0
    %v881 = vadd.f32 0.0, %v880
    %v882 = vpop.f32.mrb[0].mxu0
    %v883 = vpop.f32.mrb[0].mxu0
    %v884 = vpop.f32.mrb[0].mxu0
    %885 = vdwg.mxu0
    %v887 = vrot.slane %v881, 2
    %v888 = vrot.slane %v881, 3
    %v891 = vadd.f32 %v121, %v887
    %v892 = vadd.f32 %v124, %v888
    %v893 = vxor.u32 %v891, 2147483648
    %v894 = vxor.u32 %v892, 2147483648
    %v895 = vmul.f32 %v893, 1.442695
    %v896 = vpow.pop %v895
    %v897 = vmul.f32 %v894, 1.442695
    %v898 = vpow.pop %v897
    %v899 = vadd.f32 %v896, 1.0
    %v900 = vadd.f32 %v898, 1.0
    %v901 = vrcp.pop %v899
    %v902 = vmul.f32 1.0, %v901
    %v903 = vrcp.pop %v900
    %v904 = vmul.f32 1.0, %v903
    %v905 = vadd.f32 %v881, %v265
    %v907 = vrot.slane %v905, 2
    %v908 = vrot.slane %v905, 3
    %909 = vrot.lane.b32.xlu0 %v907, 64
    %v910 = vpop.permute.xlu0 %909
    %911 = vrot.lane.b32.xlu0 %v908, 64
    %v912 = vpop.permute.xlu0 %911
    %v915 = vmul.f32 %v902, %v910
    %v916 = vmul.f32 %v904, %v912
    %919 = vrot.lane.b32.xlu0 %v915, 64
    %v920 = vpop.permute.xlu0 %919
    %921 = vrot.lane.b32.xlu0 %v916, 64
    %v922 = vpop.permute.xlu0 %921
    %v925 = vadd.f32 %v121, %v920
    %v926 = vadd.f32 %v124, %v922
    %v927 = vtanh.pop %v925
    %v928 = vtanh.pop %v926
    %v931 = vrot.slane %v927, 1
    %v932 = vrot.slane %v928, 1
    %v935 = vsub.f32 %v829, %v931
    %v936 = vsub.f32 %v830, %v932
    %v939 = vrot.slane %v935, 7
    %v940 = vrot.slane %v936, 7
    %941 = vrot.lane.b32.xlu0 %v939, 96
    %v942 = vpop.permute.xlu0 %941
    %943 = vrot.lane.b32.xlu0 %v940, 96
    %v944 = vpop.permute.xlu0 %943
    %v947 = vmul.f32 %v902, %v942
    %v948 = vmul.f32 %v904, %v944
    %951 = vrot.lane.b32.xlu0 %v947, 32
    %v952 = vpop.permute.xlu0 %951
    %953 = vrot.lane.b32.xlu0 %v948, 32
    %v954 = vpop.permute.xlu0 %953
    %v957 = vadd.f32 %v927, %v952
    %v958 = vadd.f32 %v928, %v954
    %v959 = vpack.c.bf16 %v957, %v957
    %v960 = vpack.c.bf16 %v958, %v958
    %v963 = vunpack.c.l.b16 %v959
    %v964 = vunpack.c.l.b16 %v960
    %v965 = vrot.slane %v963, 6
    %v966 = vrot.slane %v964, 5
    %v967 = vsel %vm185, %v966, %v965
    %v968 = vpack.c.b16 %v967, %v967
    %969 = vrot.lane.b32.xlu0 %v968, 64
    %v970 = vpop.permute.xlu0 %969
    %v972 = vsel %vm82, %v970, 0
    %974 = vmatprep.subr.bf16.mxu0 0
    %975 = vmatpush1.bf16.msra.mxu0 %v198
    %976 = vmatprep.subr.bf16.mxu0 0
    %977 = vmatpush1.bf16.msra.mxu0 %v199
    %978 = vmatprep.subr.bf16.mxu0 0
    %979 = vmatpush1.bf16.msra.mxu0 0
    %980 = vmatprep.subr.bf16.mxu0 0
    %981 = vmatpush1.bf16.msra.mxu0 0
    %982 = vmatprep.subr.bf16.mxu0 0
    %983 = vmatpush1.bf16.msra.mxu0 0
    %984 = vmatprep.subr.bf16.mxu0 0
    %985 = vmatpush1.bf16.msra.mxu0 0
    %986 = vmatprep.subr.bf16.mxu0 0
    %987 = vmatpush1.bf16.msra.mxu0 0
    %988 = vmatprep.subr.bf16.mxu0 0
    %989 = vmatpush1.bf16.msra.mxu0 0
    %990 = vmatprep.subr.bf16.mxu0 0
    %991 = vmatpush1.bf16.msra.mxu0 0
    %992 = vmatprep.subr.bf16.mxu0 0
    %993 = vmatpush1.bf16.msra.mxu0 0
    %994 = vmatprep.subr.bf16.mxu0 0
    %995 = vmatpush1.bf16.msra.mxu0 0
    %996 = vmatprep.subr.bf16.mxu0 0
    %997 = vmatpush1.bf16.msra.mxu0 0
    %998 = vmatprep.subr.bf16.mxu0 0
    %999 = vmatpush1.bf16.msra.mxu0 0
    %1000 = vmatprep.subr.bf16.mxu0 0
    %1001 = vmatpush1.bf16.msra.mxu0 0
    %1002 = vmatprep.subr.bf16.mxu0 0
    %1003 = vmatpush1.bf16.msra.mxu0 0
    %1004 = vmatprep.subr.bf16.mxu0 0
    %1005 = vmatpush1.bf16.msra.mxu0 0
    %1006 = vmatprep.mubr.bf16.mxu0 0
    %1007 = vmatmul.mubr.bf16.gmra.mrb[0].mxu0 %v972
    %v1008 = vpop.f32.mrb[0].mxu0
    %v1009 = vadd.f32 0.0, %v1008
    %v1010 = vpop.f32.mrb[0].mxu0
    %v1011 = vpop.f32.mrb[0].mxu0
    %v1012 = vpop.f32.mrb[0].mxu0
    %1013 = vdwg.mxu0
    %v1015 = vrot.slane %v1009, 1
    %v1016 = vrot.slane %v1009, 2
    %v1019 = vadd.f32 %v121, %v1015
    %v1020 = vadd.f32 %v124, %v1016
    %v1021 = vxor.u32 %v1019, 2147483648
    %v1022 = vxor.u32 %v1020, 2147483648
    %v1023 = vmul.f32 %v1021, 1.442695
    %v1024 = vpow.pop %v1023
    %v1025 = vmul.f32 %v1022, 1.442695
    %v1026 = vpow.pop %v1025
    %v1027 = vadd.f32 %v1024, 1.0
    %v1028 = vadd.f32 %v1026, 1.0
    %v1029 = vrcp.pop %v1027
    %v1030 = vmul.f32 1.0, %v1029
    %v1031 = vrcp.pop %v1028
    %v1032 = vmul.f32 1.0, %v1031
    %v1033 = vadd.f32 %v1009, %v265
    %v1035 = vrot.slane %v1033, 1
    %v1036 = vrot.slane %v1033, 2
    %1037 = vrot.lane.b32.xlu0 %v1035, 64
    %v1038 = vpop.permute.xlu0 %1037
    %1039 = vrot.lane.b32.xlu0 %v1036, 64
    %v1040 = vpop.permute.xlu0 %1039
    %v1043 = vmul.f32 %v1030, %v1038
    %v1044 = vmul.f32 %v1032, %v1040
    %1047 = vrot.lane.b32.xlu0 %v1043, 64
    %v1048 = vpop.permute.xlu0 %1047
    %1049 = vrot.lane.b32.xlu0 %v1044, 64
    %v1050 = vpop.permute.xlu0 %1049
    %v1053 = vadd.f32 %v121, %v1048
    %v1054 = vadd.f32 %v124, %v1050
    %v1055 = vtanh.pop %v1053
    %v1056 = vtanh.pop %v1054
    %v1059 = vrot.slane %v1055, 1
    %v1060 = vrot.slane %v1056, 1
    %v1063 = vsub.f32 %v957, %v1059
    %v1064 = vsub.f32 %v958, %v1060
    %v1067 = vrot.slane %v1063, 7
    %v1068 = vrot.slane %v1064, 7
    %1069 = vrot.lane.b32.xlu0 %v1067, 96
    %v1070 = vpop.permute.xlu0 %1069
    %1071 = vrot.lane.b32.xlu0 %v1068, 96
    %v1072 = vpop.permute.xlu0 %1071
    %v1075 = vmul.f32 %v1030, %v1070
    %v1076 = vmul.f32 %v1032, %v1072
    %1079 = vrot.lane.b32.xlu0 %v1075, 32
    %v1080 = vpop.permute.xlu0 %1079
    %1081 = vrot.lane.b32.xlu0 %v1076, 32
    %v1082 = vpop.permute.xlu0 %1081
    %v1085 = vadd.f32 %v1055, %v1080
    %v1086 = vadd.f32 %v1056, %v1082
    %v1089 = vrot.slane %v1086, 7
    %1090 = vrot.lane.b32.xlu0 %v1085, 64
    %v1091 = vpop.permute.xlu0 %1090
    %1092 = vrot.lane.b32.xlu0 %v1089, 64
    %v1093 = vpop.permute.xlu0 %1092
    %vm1096 = vcmask 261127
    %1097 = vst.msk [vmem:[#allocation7 - $0x7] sm:$0x80] %vm1096, %v1091
    %vm1098 = vcmask 253952
    %1099 = vst.msk [vmem:[#allocation7 + $0x1] sm:$0x1] %vm1098, %v1093
    // Predicated region
    $region22: #{tpu_custom_call.1} parent=1 // pred_check
      _
    $region23: #{tpu_custom_call.1} parent=1 // pred_check_branch
      %1101 = sbr.rel (0) target = $region25
    $region24: #{tpu_custom_call.1} parent=1 // pred_region
      %s1103 = ssub.s32 32, 32
      %1104 = vsyncadd [#allocation4], %s1103
      %s1106 = sshll.u32 [#allocation7], 4
      %s1107 = int_to_ptr.vmem [resolvable:$true] %s1106
      %1109 = dma.vmem_to_hbm [thread:$0]  %s1107, 32, %s3, [#allocation4]
    $region25: #{tpu_custom_call.1} parent=1 // pred_fallthru
      _
    // Predicated region
    $region26: #{tpu_custom_call.1} parent=1 // pred_check
      _
    $region27: #{tpu_custom_call.1} parent=1 // pred_check_branch
      %1111 = sbr.rel (0) target = $region29
    $region28: #{tpu_custom_call.1} parent=1 // pred_region
      %1112 = dma.done [#allocation4], 32
    $region29: #{tpu_custom_call.1} parent=1 // pred_fallthru
      _
    %1113 = vsyncpa [#allocation3], 1
    %1114 = vsyncpa [#allocation6], 1
    %1115 = vsyncpa [#allocation4], 1

</llo_original>
